<compile_context>
chip_gen: v6e
topology: v6e:2x2x1
jax: 0.10.0
libtpu: 0.0.40
codegen_flags: <defaults>
</compile_context>

<pallas_src>
import functools

import numpy as np
import jax
import jax.numpy as jnp
from jax.experimental import pallas as pl
from jax.experimental.pallas import tpu as pltpu

N_FFT = 128
WIN_LENGTH = 128
HOP = 64                      # = N_FFT // 2 (half-chunk frame construction relies on this)
assert N_FFT == 2 * HOP
F = N_FFT // 2 + 1            # 65 onesided frequency bins
F_PACK = 2 * F - 2            # 128 packed basis rows: re bins 0..64 | im bins 1..63
MAX_FRAMES_PER_TILE = 1024    # frames per grid step (multiple of 128)


@functools.lru_cache(maxsize=None)
def _packed_basis_np():
    """Windowed real-DFT basis packed to exactly 128 rows, numpy f32 [128, 128].

    Row layout: real bins 0..64, then imag bins 1..63 (imag DC / Nyquist are
    identically zero for real input and are re-inserted inside the kernel).
    Returned as NUMPY (not jnp) so caching it never leaks a tracer between
    jit traces; the jnp constant is created fresh inside every trace.
    """
    n = np.arange(N_FFT)
    # torch.hann_window(win_length), default periodic=True
    w = 0.5 - 0.5 * np.cos(2.0 * np.pi * n / WIN_LENGTH)
    k_re = np.arange(F)               # 0..64
    k_im = np.arange(1, F - 1)        # 1..63
    b = np.concatenate(
        [np.cos(2.0 * np.pi * np.outer(k_re, n) / N_FFT),
         -np.sin(2.0 * np.pi * np.outer(k_im, n) / N_FFT)],
        axis=0) * w[None, :]                                  # [128, 128] = [f, n]
    return np.asarray(b, dtype=np.float32)


def _stft_tile_kernel(frames_ref, basis_ref, out_ref):
    # frames_ref: [128, TT]   full frames (samples x time), compute dtype
    # basis_ref : [128, 128]  packed windowed real-DFT basis (freq x samples)
    # out_ref   : [2, 65, TT] (real | imag) spectrum, final dtype
    acc = jnp.dot(basis_ref[...], frames_ref[...],
                  preferred_element_type=jnp.float32)         # [128, TT] f32
    tt = acc.shape[1]
    zero_row = jnp.zeros((1, tt), jnp.float32)
    re = acc[:F]                                              # real bins 0..64
    im = jnp.concatenate([zero_row, acc[F:], zero_row], axis=0)  # imag bins 0..64
    out_ref[0] = re.astype(out_ref.dtype)
    out_ref[1] = im.astype(out_ref.dtype)


def _stft_pallas(frames_t, tile_frames, num_tiles, out_dtype):
    """frames_t: [B, C, 128, T] (compute dtype) -> spectrum [B, 2, C, F, T]."""
    B, C, _, T = frames_t.shape
    basis = jnp.asarray(_packed_basis_np(), dtype=frames_t.dtype)   # [128, 128]
    return pl.pallas_call(
        _stft_tile_kernel,
        out_shape=jax.ShapeDtypeStruct((B, 2, C, F, T), out_dtype),
        grid=(B, C, num_tiles),
        in_specs=[
            # full-frame tile for one channel: lanes [i*TT, (i+1)*TT)
            pl.BlockSpec((None, None, N_FFT, tile_frames),
                         lambda b, c, i: (b, c, 0, i)),
            # packed basis, VMEM-resident across the whole grid
            pl.BlockSpec((F_PACK, N_FFT), lambda b, c, i: (0, 0)),
        ],
        # one grid step writes both the real and imag block of its channel
        out_specs=pl.BlockSpec((None, 2, None, F, tile_frames),
                               lambda b, c, i: (b, 0, c, 0, i)),
        compiler_params=pltpu.CompilerParams(
            dimension_semantics=("parallel", "parallel", "parallel")),
    )(frames_t, basis)


def stft_input_forward(x):
    """Pallas equivalent of STFTInput.forward (spec_transform_type=None)."""
    orig_dtype = x.dtype
    if x.ndim == 2:
        x = x[:, None, :]                                  # [B, 1, N]
    B, C, N = x.shape
    assert N > HOP, "center=True reflect padding requires Nsamples > n_fft // 2"
    T = N // HOP + 1

    half = orig_dtype in (jnp.dtype(jnp.float16), jnp.dtype(jnp.bfloat16))
    compute_dtype = jnp.bfloat16 if half else jnp.float32   # bf16 MXU fast path
    out_dtype = orig_dtype if half else jnp.float32         # torch casts output back

    # torch.stft(center=True): reflect-pad n_fft//2 on both sides.
    xf = x.astype(compute_dtype)
    xp = jnp.pad(xf, ((0, 0), (0, 0), (HOP, HOP)), mode="reflect")     # [B,C,N+128]
    # hop == n_fft/2: frame t = [chunk t | chunk t+1] of non-overlapping 64-chunks.
    # Pad/reshape/slice/concat/transpose below are left to XLA producer fusion.
    chunks = xp[:, :, :(T + 1) * HOP].reshape(B, C, T + 1, HOP)        # [B,C,T+1,64]
    chunks_t = jnp.transpose(chunks, (0, 1, 3, 2))                     # [B,C,64,T+1]
    frames_t = jnp.concatenate([chunks_t[..., :T], chunks_t[..., 1:]],
                               axis=2)                                 # [B,C,128,T]

    # Tile sizing: big lane-dense tiles; keep >= 2 grid steps for v7x megacore.
    num_tiles = pl.cdiv(T, MAX_FRAMES_PER_TILE)
    if B * C * num_tiles < 2 and T > 128:
        num_tiles = 2
    tile_frames = ((pl.cdiv(T, num_tiles) + 127) // 128) * 128
    num_tiles = pl.cdiv(T, tile_frames)

    spec = _stft_pallas(frames_t, tile_frames, num_tiles, out_dtype)   # [B,2,C,F,T]

    # spec_transform_type=None -> identity transform
    # TODO(synk): 'exponent'/'log' spec transforms (complex abs/angle) not wired up.

    return spec.reshape(B, 2 * C, F, T)                    # free reshape, final layout


def _reference_forward(x):
    """Pure-JAX reference (dense frame gather + full-precision matmul)."""
    if x.ndim == 2:
        x = x[:, None, :]
    B, C, N = x.shape
    M = B * C
    T = N // HOP + 1
    xf = x.astype(jnp.float32).reshape(M, N)
    xp = jnp.pad(xf, ((0, 0), (HOP, HOP)), mode="reflect")
    idx = jnp.arange(T)[:, None] * HOP + jnp.arange(N_FFT)[None, :]
    frames = xp[:, idx]                                    # [M, T, 128]
    n = jnp.arange(N_FFT)
    k = jnp.arange(F)
    w = 0.5 - 0.5 * jnp.cos(2.0 * jnp.pi * n / WIN_LENGTH)
    ang = 2.0 * jnp.pi * jnp.outer(n, k) / N_FFT
    re_b = jnp.cos(ang) * w[:, None]
    im_b = -jnp.sin(ang) * w[:, None]
    hi = jax.lax.Precision.HIGHEST
    re = jnp.einsum("mtn,nf->mft", frames, re_b, precision=hi).reshape(B, C, F, T)
    im = jnp.einsum("mtn,nf->mft", frames, im_b, precision=hi).reshape(B, C, F, T)
    return jnp.concatenate([re, im], axis=1)


if __name__ == "__main__":
    key = jax.random.PRNGKey(0)
    B, C, N = 2, 2, 256                                    # T = 256 // 64 + 1 = 5
    T = N // HOP + 1
    x = jax.random.normal(key, (B, C, N), dtype=jnp.float32)

    fwd = jax.jit(stft_input_forward)
    out = jax.block_until_ready(fwd(x))
    assert out.shape == (B, 2 * C, F, T), out.shape
    assert out.dtype == jnp.float32, out.dtype

    ref = jax.block_until_ready(_reference_forward(x))
    scale = float(jnp.max(jnp.abs(ref)))
    err = float(jnp.max(jnp.abs(out - ref)))
    assert err <= 1e-2 * scale + 1e-5, (err, scale)

    # 2-D input path: [B, N] -> [B, 2, F, T]  (this call hit the tracer leak before)
    x2 = jax.random.normal(jax.random.PRNGKey(1), (B, N), dtype=jnp.float32)
    out2 = jax.block_until_ready(jax.jit(stft_input_forward)(x2))
    assert out2.shape == (B, 2, F, T), out2.shape
    ref2 = _reference_forward(x2)
    err2 = float(jnp.max(jnp.abs(out2 - ref2)))
    assert err2 <= 1e-2 * float(jnp.max(jnp.abs(ref2))) + 1e-5, err2

    # bf16 fast path: bf16 MXU compute, bf16 output (matches torch output cast).
    xb = x.astype(jnp.bfloat16)
    outb = jax.block_until_ready(jax.jit(stft_input_forward)(xb))
    assert outb.shape == (B, 2 * C, F, T), outb.shape
    assert outb.dtype == jnp.bfloat16, outb.dtype
    errb = float(jnp.max(jnp.abs(outb.astype(jnp.float32) - ref)))
    assert errb <= 5e-2 * scale + 1e-3, (errb, scale)

    print("KERNEL_OK")
</pallas_src>

<mosaic_0001>
module attributes {stable_mosaic.version = 11 : i64} {
  func.func @_stft_tile_kernel(%arg0: i32, %arg1: i32, %arg2: i32, %arg3: memref<1x1x128x128xf32, #tpu.memory_space<vmem>>, %arg4: memref<128x128xf32, #tpu.memory_space<vmem>>, %arg5: memref<1x2x1x65x128xf32, #tpu.memory_space<vmem>>) attributes {dimension_semantics = [#tpu.dimension_semantics<parallel>, #tpu.dimension_semantics<parallel>, #tpu.dimension_semantics<parallel>], iteration_bounds = array<i64: 2, 2, 1>, scalar_prefetch = 0 : i64, scratch_operands = 0 : i64, tpu.core_type = #tpu.core_type<tc>, window_params = [{transform_indices = @transform_0, window_bounds = array<i64: 1, 1, 128, 128>}, {pipeline_mode = #tpu.pipeline_mode<synchronous>, transform_indices = @transform_1, window_bounds = array<i64: 128, 128>}, {transform_indices = @transform_2, window_bounds = array<i64: 1, 2, 1, 65, 128>}]} {
    %c0 = arith.constant 0 : index
    %c0_0 = arith.constant 0 : index
    %0 = vector.load %arg4[%c0, %c0_0] : memref<128x128xf32, #tpu.memory_space<vmem>>, vector<128x128xf32>
    %c0_1 = arith.constant 0 : index
    %c0_2 = arith.constant 0 : index
    %c0_3 = arith.constant 0 : index
    %c0_4 = arith.constant 0 : index
    %1 = vector.load %arg3[%c0_1, %c0_2, %c0_3, %c0_4] : memref<1x1x128x128xf32, #tpu.memory_space<vmem>>, vector<1x1x128x128xf32>
    %2 = vector.shape_cast %1 : vector<1x1x128x128xf32> to vector<128x128xf32>
    %cst = arith.constant dense<0.000000e+00> : vector<128x128xf32>
    %3 = tpu.matmul %0, %2, %cst {dimension_numbers = #tpu.dot_dimension_numbers<[1], [0], [0], [1], [0, 0, 1, 1], [], []>} : vector<128x128xf32>, vector<128x128xf32>, vector<128x128xf32> -> vector<128x128xf32>
    %cst_5 = arith.constant 0.000000e+00 : f32
    %4 = vector.broadcast %cst_5 : f32 to vector<1x128xf32>
    %5 = vector.extract_strided_slice %3 {offsets = [0, 0], sizes = [65, 128], strides = [1, 1]} : vector<128x128xf32> to vector<65x128xf32>
    %6 = vector.extract_strided_slice %3 {offsets = [65, 0], sizes = [63, 128], strides = [1, 1]} : vector<128x128xf32> to vector<63x128xf32>
    %7 = tpu.concatenate %4, %6, %4 in 0 : vector<1x128xf32>, vector<63x128xf32>, vector<1x128xf32> -> vector<65x128xf32>
    %c0_6 = arith.constant 0 : index
    %c0_7 = arith.constant 0 : index
    %c0_8 = arith.constant 0 : index
    %c0_9 = arith.constant 0 : index
    %c0_10 = arith.constant 0 : index
    %8 = vector.load %arg5[%c0_6, %c0_7, %c0_8, %c0_9, %c0_10] : memref<1x2x1x65x128xf32, #tpu.memory_space<vmem>>, vector<1x1x1x65x128xf32>
    %9 = vector.shape_cast %8 : vector<1x1x1x65x128xf32> to vector<65x128xf32>
    %10 = vector.shape_cast %5 : vector<65x128xf32> to vector<1x1x1x65x128xf32>
    tpu.vector_store %arg5[%c0_6, %c0_7, %c0_8, %c0_9, %c0_10], %10 {strides = array<i32>} : memref<1x2x1x65x128xf32, #tpu.memory_space<vmem>>, vector<1x1x1x65x128xf32>,
    %c0_11 = arith.constant 0 : index
    %c1 = arith.constant 1 : index
    %c0_12 = arith.constant 0 : index
    %c0_13 = arith.constant 0 : index
    %c0_14 = arith.constant 0 : index
    %11 = vector.load %arg5[%c0_11, %c1, %c0_12, %c0_13, %c0_14] : memref<1x2x1x65x128xf32, #tpu.memory_space<vmem>>, vector<1x1x1x65x128xf32>
    %12 = vector.shape_cast %11 : vector<1x1x1x65x128xf32> to vector<65x128xf32>
    %13 = vector.shape_cast %7 : vector<65x128xf32> to vector<1x1x1x65x128xf32>
    tpu.vector_store %arg5[%c0_11, %c1, %c0_12, %c0_13, %c0_14], %13 {strides = array<i32>} : memref<1x2x1x65x128xf32, #tpu.memory_space<vmem>>, vector<1x1x1x65x128xf32>,
    return
  }
  func.func @transform_0(%arg0: i32, %arg1: i32, %arg2: i32) -> (i32, i32, i32, i32) {
    %c0_i32 = arith.constant 0 : i32
    %c0_i32_0 = arith.constant 0 : i32
    return %arg0, %arg1, %c0_i32, %arg2 : i32, i32, i32, i32
  }
  func.func @transform_1(%arg0: i32, %arg1: i32, %arg2: i32) -> (i32, i32) {
    %c0_i32 = arith.constant 0 : i32
    %c0_i32_0 = arith.constant 0 : i32
    %c0_i32_1 = arith.constant 0 : i32
    return %c0_i32, %c0_i32_0 : i32, i32
  }
  func.func @transform_2(%arg0: i32, %arg1: i32, %arg2: i32) -> (i32, i32, i32, i32, i32) {
    %c0_i32 = arith.constant 0 : i32
    %c0_i32_0 = arith.constant 0 : i32
    %c0_i32_1 = arith.constant 0 : i32
    return %arg0, %c0_i32, %arg1, %c0_i32_0, %arg2 : i32, i32, i32, i32, i32
  }
}

</mosaic_0001>

<llo_original>
// kernel: stft_input_forward.1
$region0: #{stft_input_forward.1}
  #allocation0 [shape = 'u32[]', space=smem, size = 0x4, offset = 0x4, fixed_abs, tag = 'smem constant byte address 0x4 - core index']
  #allocation1 [shape = 'u32[144,128]{1,0:T(1,128)}', space=vmem, size = 0x12000, scoped, tag = 'internal scratch']
  %s0 = inlined_call_operand.vmem [shape: f32[2,2,128,5], index: 0, kind: input, shape index: {}]
  %s1 = inlined_call_operand.vmem [shape: f32[128,128], index: 1, kind: input, shape index: {}]
  %s2 = inlined_call_operand.vmem [shape: f32[2,2,2,65,5], index: 2, kind: output, shape index: {}]
  %s3 = sld [smem:[#allocation0]]
  $region75: #{stft_input_forward.1} parent=0
    _
  %s5 = ssub.s32 1, %s3
  %s6 = scalar_select 0, %s5, %s3
  $region1: #{stft_input_forward.1} parent=0
    #allocation2 [shape = 'u8[147456]{0}', space=vmem, size = 0x24000, scoped, tag = 'output window, operand 0']
    loop: start=0, step=1, limit=6
    $region2: #{stft_input_forward.1} parent=1 // loop_pre_header
      _
    $region3: #{stft_input_forward.1} parent=1 // loop_header
      %s8 = sphi 0, %s12
      %p9 = scmp.ge.s32.totalorder %s8, 6
      %s15 = sphi 0, %s34
      %s16 = sphi 0, %s30
      %s17 = sphi 0, %s26
      %s18 = sphi 0, %s15
      %s19 = sphi 0, %s16
      %s20 = sphi 0, %s17
      %s21 = sphi 0, %s18
      %s22 = sphi 0, %s19
      %s23 = sphi 0, %s20
      %s41 = sphi 0, %s43
      %s44 = sphi 0, %s41
      %s45 = sphi 0, %s44
      %s61 = sphi 0, %s45
      %s65 = sphi 0, %s65
      %s67 = sphi 0, %s65
      %s68 = sphi 0, %s67
      %s82 = sphi 0, %s68
      %s92 = sphi 0, %s94
      %s95 = sphi 0, %s92
      %s96 = sphi 0, %s95
      %s112 = sphi 0, %s96
    $region4: #{stft_input_forward.1} parent=1 // loop_header_branch
      %11 = sbr.rel (%p9) target = $region8
    $region5: #{stft_input_forward.1} parent=1 // loop_body
      %s13 = ssub.s32 %s8, 1
      %s14 = ssub.s32 %s8, 2
      %s24 = sadd.s32 1, %s17
      %p25 = scmp.ge.s32.totalorder %s24, 1
      %s26 = scalar_select %p25, 0, %s24
      %s27 = sadd.s32 1, %s16
      %s28 = scalar_select %p25, %s27, %s16
      %p29 = scmp.ge.s32.totalorder %s28, 2
      %s30 = scalar_select %p29, 0, %s28
      %s31 = sadd.s32 1, %s15
      %s32 = scalar_select %p29, %s31, %s15
      %p33 = scmp.ge.s32.totalorder %s32, 2
      %s34 = scalar_select %p33, 0, %s32
      %s35 = ssub.s32 %s15, %s34
      %s36 = ssub.s32 %s16, %s30
      %s37 = sor.u32 %s35, %s36
      %s38 = ssub.s32 %s17, %s26
      %s39 = sor.u32 %s37, %s38
      %p40 = scmp.eq.s32.totalorder %s39, 0
      %s42 = sadd.s32 %s41, 1
      %s43 = scalar_select %p40, %s41, %s42
      %p46 = pneg %p40
      %p47 = scmp.eq.s32.totalorder %s8, 3
      %p48 = por %p46, %p47
      %p49 = scmp.ne.s32.totalorder %s41, %s44
      %p50 = scmp.eq.s32.totalorder %s8, 0
      %p51 = por %p49, %p50
      %p52 = scmp.ne.s32.totalorder %s41, %s44
      %p53 = scmp.eq.s32.totalorder %s13, 3
      %p54 = por %p52, %p53
      %p55 = scmp.ne.s32.totalorder %s44, %s45
      %p56 = scmp.eq.s32.totalorder %s13, 0
      %p57 = por %p55, %p56
      %p58 = scmp.ne.s32.totalorder %s44, %s45
      %p59 = scmp.eq.s32.totalorder %s14, 3
      %p60 = por %p58, %p59
      %p62 = scmp.ne.s32.totalorder %s45, %s61
      %p63 = scmp.eq.s32.totalorder %s14, 0
      %p64 = por %p62, %p63
      %s66 = sadd.s32 %s65, 1
      %p69 = scmp.eq.s32.totalorder %s8, 3
      %p70 = scmp.ne.s32.totalorder %s65, %s67
      %p71 = scmp.eq.s32.totalorder %s8, 0
      %p72 = por %p70, %p71
      %p73 = scmp.ne.s32.totalorder %s65, %s67
      %p74 = scmp.eq.s32.totalorder %s13, 3
      %p75 = por %p73, %p74
      %p76 = scmp.ne.s32.totalorder %s67, %s68
      %p77 = scmp.eq.s32.totalorder %s13, 0
      %p78 = por %p76, %p77
      %p79 = scmp.ne.s32.totalorder %s67, %s68
      %p80 = scmp.eq.s32.totalorder %s14, 3
      %p81 = por %p79, %p80
      %p83 = scmp.ne.s32.totalorder %s68, %s82
      %p84 = scmp.eq.s32.totalorder %s14, 0
      %p85 = por %p83, %p84
      %s86 = ssub.s32 %s15, %s34
      %s87 = ssub.s32 %s16, %s30
      %s88 = sor.u32 %s86, %s87
      %s89 = ssub.s32 %s17, %s26
      %s90 = sor.u32 %s88, %s89
      %p91 = scmp.eq.s32.totalorder %s90, 0
      %s93 = sadd.s32 %s92, 1
      %s94 = scalar_select %p91, %s92, %s93
      %p97 = pneg %p91
      %p98 = scmp.eq.s32.totalorder %s8, 3
      %p99 = por %p97, %p98
      %p100 = scmp.ne.s32.totalorder %s92, %s95
      %p101 = scmp.eq.s32.totalorder %s8, 0
      %p102 = por %p100, %p101
      %p103 = scmp.ne.s32.totalorder %s92, %s95
      %p104 = scmp.eq.s32.totalorder %s13, 3
      %p105 = por %p103, %p104
      %p106 = scmp.ne.s32.totalorder %s95, %s96
      %p107 = scmp.eq.s32.totalorder %s13, 0
      %p108 = por %p106, %p107
      %p109 = scmp.ne.s32.totalorder %s95, %s96
      %p110 = scmp.eq.s32.totalorder %s14, 3
      %p111 = por %p109, %p110
      %p113 = scmp.ne.s32.totalorder %s96, %s112
      %p114 = scmp.eq.s32.totalorder %s14, 0
      %p115 = por %p113, %p114
      %p116 = scmp.le.s32.totalorder 1, %s8
      %p117 = scmp.lt.s32.totalorder %s8, 5
      %p118 = pnand %p116, %p117
      %p119 = pneg %p118
      // Predicated region
      $region9: #{stft_input_forward.1} parent=5 // pred_check
        _
      $region10: #{stft_input_forward.1} parent=5 // pred_check_branch
        %121 = sbr.rel (%p118) target = $region12
      $region11: #{stft_input_forward.1} parent=5 // pred_region
        %s122 = ssub.s32 %s8, 1
        // Predicated region
        $region13: #{stft_input_forward.1} parent=11 // pred_check
          %p123 = pneg %p78
        $region14: #{stft_input_forward.1} parent=11 // pred_check_branch
          %125 = sbr.rel (%p123) target = $region16
        $region15: #{stft_input_forward.1} parent=11 // pred_region
          _
        $region16: #{stft_input_forward.1} parent=11 // pred_fallthru
          _
      $region12: #{stft_input_forward.1} parent=5 // pred_fallthru
        _
      %p126 = scmp.lt.s32.totalorder %s8, 4
      // Predicated region
      $region17: #{stft_input_forward.1} parent=5 // pred_check
        %p127 = pneg %p126
      $region18: #{stft_input_forward.1} parent=5 // pred_check_branch
        %129 = sbr.rel (%p127) target = $region20
      $region19: #{stft_input_forward.1} parent=5 // pred_region
        // Predicated region
        $region21: #{stft_input_forward.1} parent=19 // pred_check
          %p130 = pneg %p51
        $region22: #{stft_input_forward.1} parent=19 // pred_check_branch
          %132 = sbr.rel (%p130) target = $region24
        $region23: #{stft_input_forward.1} parent=19 // pred_region
          %p133 = scmp.lt.s32.totalorder %s15, 1
          %s134 = scalar_select %p133, %s15, 1
          %p135 = scmp.lt.s32.totalorder %s16, 1
          %s136 = scalar_select %p135, %s16, 1
          %p137 = scmp.lt.s32.totalorder %s17, 0
          %s138 = scalar_select %p137, %s17, 0
          %s139 = smul.addr %s136, 16
          %s140 = sadd.s32 %s138, %s139
          %s141 = smul.addr %s134, 32
          %s142 = sadd.s32 %s140, %s141
          %s143 = smul.addr %s142, 8
          %s144 = scalar_lea.vmem %s0, %s143
        $region24: #{stft_input_forward.1} parent=19 // pred_fallthru
          _
      $region20: #{stft_input_forward.1} parent=5 // pred_fallthru
        _
      %p145 = scmp.le.s32.totalorder 1, %s8
      %p146 = scmp.lt.s32.totalorder %s8, 5
      %p147 = pnand %p145, %p146
      %p148 = pneg %p147
      // Predicated region
      $region25: #{stft_input_forward.1} parent=5 // pred_check
        _
      $region26: #{stft_input_forward.1} parent=5 // pred_check_branch
        %150 = sbr.rel (%p147) target = $region28
      $region27: #{stft_input_forward.1} parent=5 // pred_region
        %s151 = ssub.s32 %s8, 1
        %p152 = scmp.lt.s32.totalorder %s18, 1
        %s153 = scalar_select %p152, %s18, 1
        %p154 = scmp.lt.s32.totalorder %s19, 1
        %s155 = scalar_select %p154, %s19, 1
        %p156 = scmp.lt.s32.totalorder %s20, 0
        %s157 = scalar_select %p156, %s20, 0
        %s158 = smul.addr %s155, 16
        %s159 = sadd.s32 %s157, %s158
        %s160 = smul.addr %s153, 32
        %s161 = sadd.s32 %s159, %s160
        %s162 = smul.addr %s161, 8
        %s163 = scalar_lea.vmem %s0, %s162
        %p164 = pneg %p57
        %p165 = pneg %p54
        %p166 = pneg %p78
        %p167 = pneg %p75
        %p168 = pneg %p108
        %p169 = pneg %p105
        %s170 = sand.u32 %s95, 1
        %s171 = sand.u32 %s95, 1
        %s172 = smul.addr %s171, 144
        %s173 = scalar_lea.vmem [#allocation2], %s172
        %p174 = scmp.lt.s32.totalorder %s18, 1
        %s175 = scalar_select %p174, %s18, 1
        %p176 = scmp.lt.s32.totalorder %s19, 1
        %s177 = scalar_select %p176, %s19, 1
        %p178 = scmp.lt.s32.totalorder %s20, 0
        %s179 = scalar_select %p178, %s20, 0
        %s180 = smul.addr %s177, 16
        %s181 = sadd.s32 %s179, %s180
        %s182 = smul.addr %s175, 32
        %s183 = sadd.s32 %s181, %s182
        %s184 = smul.addr %s183, 8
        %s185 = scalar_lea.vmem %s0, %s184
        %v186 = vld [vmem:[%s1] sm:$0xff]
        %v187 = vld [vmem:[%s1 + $0x8] sm:$0xff]
        %v188 = vld [vmem:[%s1 + $0x10] sm:$0xff]
        %v189 = vld [vmem:[%s1 + $0x18] sm:$0xff]
        %v190 = vld [vmem:[%s1 + $0x20] sm:$0xff]
        %v191 = vld [vmem:[%s1 + $0x28] sm:$0xff]
        %v192 = vld [vmem:[%s1 + $0x30] sm:$0xff]
        %v193 = vld [vmem:[%s1 + $0x38] sm:$0xff]
        %v194 = vld [vmem:[%s1 + $0x40] sm:$0xff]
        %v195 = vld [vmem:[%s1 + $0x48] sm:$0xff]
        %v196 = vld [vmem:[%s1 + $0x50] sm:$0xff]
        %v197 = vld [vmem:[%s1 + $0x58] sm:$0xff]
        %v198 = vld [vmem:[%s1 + $0x60] sm:$0xff]
        %v199 = vld [vmem:[%s1 + $0x68] sm:$0xff]
        %v200 = vld [vmem:[%s1 + $0x70] sm:$0xff]
        %v201 = vld [vmem:[%s1 + $0x78] sm:$0xff]
        %v202 = vld [vmem:[%s185] sm:$0xff]
        %v203 = vld [vmem:[%s185 + $0x8] sm:$0xff]
        %v204 = vld [vmem:[%s185 + $0x10] sm:$0xff]
        %v205 = vld [vmem:[%s185 + $0x18] sm:$0xff]
        %v206 = vld [vmem:[%s185 + $0x20] sm:$0xff]
        %v207 = vld [vmem:[%s185 + $0x28] sm:$0xff]
        %v208 = vld [vmem:[%s185 + $0x30] sm:$0xff]
        %v209 = vld [vmem:[%s185 + $0x38] sm:$0xff]
        %v210 = vld [vmem:[%s185 + $0x40] sm:$0xff]
        %v211 = vld [vmem:[%s185 + $0x48] sm:$0xff]
        %v212 = vld [vmem:[%s185 + $0x50] sm:$0xff]
        %v213 = vld [vmem:[%s185 + $0x58] sm:$0xff]
        %v214 = vld [vmem:[%s185 + $0x60] sm:$0xff]
        %v215 = vld [vmem:[%s185 + $0x68] sm:$0xff]
        %v216 = vld [vmem:[%s185 + $0x70] sm:$0xff]
        %v217 = vld [vmem:[%s185 + $0x78] sm:$0xff]
        %218 = vmatprep.subr.mxu0 0.0
        %219 = vmatpush1.msra.mxu0 %v217
        %220 = vmatprep.subr.mxu0 0.0
        %221 = vmatpush1.msra.mxu0 %v216
        %222 = vmatprep.subr.mxu0 0.0
        %223 = vmatpush1.msra.mxu0 %v215
        %224 = vmatprep.subr.mxu0 0.0
        %225 = vmatpush1.msra.mxu0 %v214
        %226 = vmatprep.subr.mxu0 0.0
        %227 = vmatpush1.msra.mxu0 %v213
        %228 = vmatprep.subr.mxu0 0.0
        %229 = vmatpush1.msra.mxu0 %v212
        %230 = vmatprep.subr.mxu0 0.0
        %231 = vmatpush1.msra.mxu0 %v211
        %232 = vmatprep.subr.mxu0 0.0
        %233 = vmatpush1.msra.mxu0 %v210
        %234 = vmatprep.subr.mxu0 0.0
        %235 = vmatpush1.msra.mxu0 %v209
        %236 = vmatprep.subr.mxu0 0.0
        %237 = vmatpush1.msra.mxu0 %v208
        %238 = vmatprep.subr.mxu0 0.0
        %239 = vmatpush1.msra.mxu0 %v207
        %240 = vmatprep.subr.mxu0 0.0
        %241 = vmatpush1.msra.mxu0 %v206
        %242 = vmatprep.subr.mxu0 0.0
        %243 = vmatpush1.msra.mxu0 %v205
        %244 = vmatprep.subr.mxu0 0.0
        %245 = vmatpush1.msra.mxu0 %v204
        %246 = vmatprep.subr.mxu0 0.0
        %247 = vmatpush1.msra.mxu0 %v203
        %248 = vmatprep.subr.mxu0 0.0
        %249 = vmatpush1.msra.mxu0 %v202
        %250 = vmatprep.subr.mxu0 0.0
        %251 = vmatpush2.msra.mxu0 0.0
        %252 = vmatprep.subr.mxu0 0.0
        %253 = vmatpush2.msra.mxu0 0.0
        %254 = vmatprep.subr.mxu0 0.0
        %255 = vmatpush2.msra.mxu0 0.0
        %256 = vmatprep.subr.mxu0 0.0
        %257 = vmatpush2.msra.mxu0 0.0
        %258 = vmatprep.subr.mxu0 0.0
        %259 = vmatpush2.msra.mxu0 0.0
        %260 = vmatprep.subr.mxu0 0.0
        %261 = vmatpush2.msra.mxu0 0.0
        %262 = vmatprep.subr.mxu0 0.0
        %263 = vmatpush2.msra.mxu0 0.0
        %264 = vmatprep.subr.mxu0 0.0
        %265 = vmatpush2.msra.mxu0 0.0
        %266 = vmatprep.subr.mxu0 0.0
        %267 = vmatpush2.msra.mxu0 0.0
        %268 = vmatprep.subr.mxu0 0.0
        %269 = vmatpush2.msra.mxu0 0.0
        %270 = vmatprep.subr.mxu0 0.0
        %271 = vmatpush2.msra.mxu0 0.0
        %272 = vmatprep.subr.mxu0 0.0
        %273 = vmatpush2.msra.mxu0 0.0
        %274 = vmatprep.subr.mxu0 0.0
        %275 = vmatpush2.msra.mxu0 0.0
        %276 = vmatprep.subr.mxu0 0.0
        %277 = vmatpush2.msra.mxu0 0.0
        %278 = vmatprep.subr.mxu0 0.0
        %279 = vmatpush2.msra.mxu0 0.0
        %280 = vmatprep.subr.mxu0 0.0
        %281 = vmatpush2.msra.mxu0 0.0
        %282 = vmatprep.mubr.f32.mxu0 0.0
        %283 = vmatmul.mubr.f32.gmra.mxu0 %v186
        %v284 = vpop.f32.mrf.mxu0
        %v285 = vadd.f32 0.0, %v284
        %v286 = vpop.f32.mrf.mxu0
        %287 = vmatprep.mubr.f32.mxu0 0.0
        %288 = vmatmul.mubr.f32.gmra.mxu0 %v187
        %v289 = vpop.f32.mrf.mxu0
        %v290 = vadd.f32 0.0, %v289
        %v291 = vpop.f32.mrf.mxu0
        %292 = vmatprep.mubr.f32.mxu0 0.0
        %293 = vmatmul.mubr.f32.gmra.mxu0 %v188
        %v294 = vpop.f32.mrf.mxu0
        %v295 = vadd.f32 0.0, %v294
        %v296 = vpop.f32.mrf.mxu0
        %297 = vmatprep.mubr.f32.mxu0 0.0
        %298 = vmatmul.mubr.f32.gmra.mxu0 %v189
        %v299 = vpop.f32.mrf.mxu0
        %v300 = vadd.f32 0.0, %v299
        %v301 = vpop.f32.mrf.mxu0
        %302 = vmatprep.mubr.f32.mxu0 0.0
        %303 = vmatmul.mubr.f32.gmra.mxu0 %v190
        %v304 = vpop.f32.mrf.mxu0
        %v305 = vadd.f32 0.0, %v304
        %v306 = vpop.f32.mrf.mxu0
        %307 = vmatprep.mubr.f32.mxu0 0.0
        %308 = vmatmul.mubr.f32.gmra.mxu0 %v191
        %v309 = vpop.f32.mrf.mxu0
        %v310 = vadd.f32 0.0, %v309
        %v311 = vpop.f32.mrf.mxu0
        %312 = vmatprep.mubr.f32.mxu0 0.0
        %313 = vmatmul.mubr.f32.gmra.mxu0 %v192
        %v314 = vpop.f32.mrf.mxu0
        %v315 = vadd.f32 0.0, %v314
        %v316 = vpop.f32.mrf.mxu0
        %317 = vmatprep.mubr.f32.mxu0 0.0
        %318 = vmatmul.mubr.f32.gmra.mxu0 %v193
        %v319 = vpop.f32.mrf.mxu0
        %v320 = vadd.f32 0.0, %v319
        %v321 = vpop.f32.mrf.mxu0
        %322 = vmatprep.mubr.f32.mxu0 0.0
        %323 = vmatmul.mubr.f32.gmra.mxu0 %v194
        %v324 = vpop.f32.mrf.mxu0
        %v325 = vadd.f32 0.0, %v324
        %v326 = vpop.f32.mrf.mxu0
        %327 = vmatprep.mubr.f32.mxu0 0.0
        %328 = vmatmul.mubr.f32.gmra.mxu0 %v195
        %v329 = vpop.f32.mrf.mxu0
        %v330 = vadd.f32 0.0, %v329
        %v331 = vpop.f32.mrf.mxu0
        %332 = vmatprep.mubr.f32.mxu0 0.0
        %333 = vmatmul.mubr.f32.gmra.mxu0 %v196
        %v334 = vpop.f32.mrf.mxu0
        %v335 = vadd.f32 0.0, %v334
        %v336 = vpop.f32.mrf.mxu0
        %337 = vmatprep.mubr.f32.mxu0 0.0
        %338 = vmatmul.mubr.f32.gmra.mxu0 %v197
        %v339 = vpop.f32.mrf.mxu0
        %v340 = vadd.f32 0.0, %v339
        %v341 = vpop.f32.mrf.mxu0
        %342 = vmatprep.mubr.f32.mxu0 0.0
        %343 = vmatmul.mubr.f32.gmra.mxu0 %v198
        %v344 = vpop.f32.mrf.mxu0
        %v345 = vadd.f32 0.0, %v344
        %v346 = vpop.f32.mrf.mxu0
        %347 = vmatprep.mubr.f32.mxu0 0.0
        %348 = vmatmul.mubr.f32.gmra.mxu0 %v199
        %v349 = vpop.f32.mrf.mxu0
        %v350 = vadd.f32 0.0, %v349
        %v351 = vpop.f32.mrf.mxu0
        %352 = vmatprep.mubr.f32.mxu0 0.0
        %353 = vmatmul.mubr.f32.gmra.mxu0 %v200
        %v354 = vpop.f32.mrf.mxu0
        %v355 = vadd.f32 0.0, %v354
        %v356 = vpop.f32.mrf.mxu0
        %357 = vmatprep.mubr.f32.mxu0 0.0
        %358 = vmatmul.mubr.f32.gmra.mxu0 %v201
        %v359 = vpop.f32.mrf.mxu0
        %v360 = vadd.f32 0.0, %v359
        %v361 = vpop.f32.mrf.mxu0
        %362 = vdwg.mxu0
        %vm363 = vcmask 1040384
        %v364 = vsel %vm363, 0.0, %v325
        %365 = vst [vmem:[%s173] sm:$0xff] %v285
        %366 = vst [vmem:[%s173 + $0x8] sm:$0xff] %v290
        %367 = vst [vmem:[%s173 + $0x10] sm:$0xff] %v295
        %368 = vst [vmem:[%s173 + $0x18] sm:$0xff] %v300
        %369 = vst [vmem:[%s173 + $0x20] sm:$0xff] %v305
        %370 = vst [vmem:[%s173 + $0x28] sm:$0xff] %v310
        %371 = vst [vmem:[%s173 + $0x30] sm:$0xff] %v315
        %372 = vst [vmem:[%s173 + $0x38] sm:$0xff] %v320
        %373 = vst [vmem:[%s173 + $0x40] sm:$0x1] %v325
        %s374 = scalar_lea.vmem %s173, 72 [#allocation2]
        %375 = vst [vmem:[%s374] sm:$0xff] %v364
        %376 = vst [vmem:[%s374 + $0x8] sm:$0xff] %v330
        %377 = vst [vmem:[%s374 + $0x10] sm:$0xff] %v335
        %378 = vst [vmem:[%s374 + $0x18] sm:$0xff] %v340
        %379 = vst [vmem:[%s374 + $0x20] sm:$0xff] %v345
        %380 = vst [vmem:[%s374 + $0x28] sm:$0xff] %v350
        %381 = vst [vmem:[%s374 + $0x30] sm:$0xff] %v355
        %382 = vst [vmem:[%s374 + $0x38] sm:$0xff] %v360
        %383 = vst [vmem:[%s374 + $0x40] sm:$0x1] 0.0
        %s384 = sand.u32 %s95, 1
        %s385 = sand.u32 %s95, 1
        %s386 = smul.addr %s385, 144
        %s387 = scalar_lea.vmem [#allocation2], %s386
        // Predicated region
        $region29: #{stft_input_forward.1} parent=27 // pred_check
          %p388 = pneg %p105
        $region30: #{stft_input_forward.1} parent=27 // pred_check_branch
          %390 = sbr.rel (%p388) target = $region32
        $region31: #{stft_input_forward.1} parent=27 // pred_region
          %s391 = smul.addr %s19, 9
          %s392 = sadd.s32 %s20, %s391
          %s393 = smul.addr %s18, 36
          %s394 = sadd.s32 %s392, %s393
          %s395 = smul.addr %s394, 8
          %s396 = scalar_lea.vmem %s2, %s395
          // Predicated region
          $region33: #{stft_input_forward.1} parent=31 // pred_check
            _
          $region34: #{stft_input_forward.1} parent=31 // pred_check_branch
            %398 = sbr.rel (0) target = $region36
          $region35: #{stft_input_forward.1} parent=31 // pred_region
            // Predicated region
            $region37: #{stft_input_forward.1} parent=35 // pred_check
              _
            $region38: #{stft_input_forward.1} parent=35 // pred_check_branch
              %400 = sbr.rel (0) target = $region40
            $region39: #{stft_input_forward.1} parent=35 // pred_region
              // Predicated region
              $region52: #{stft_input_forward.1} parent=39 // pred_check
                _
              $region53: #{stft_input_forward.1} parent=39 // pred_check_branch
                %450 = sbr.rel (0) target = $region55
              $region54: #{stft_input_forward.1} parent=39 // pred_region
                loop: start=0, step=1, limit=1
                $region56: #{stft_input_forward.1} parent=54 // loop_pre_header
                  _
                $region57: #{stft_input_forward.1} parent=54 // loop_header
                  %s452 = sphi 0, %s456
                  %p453 = scmp.ge.s32.totalorder %s452, 1
                  %s457 = sphi %s387, %s387
                  %s458 = sphi %s396, %s396
                $region58: #{stft_input_forward.1} parent=54 // loop_header_branch
                  %455 = sbr.rel (%p453) target = $region62
                $region59: #{stft_input_forward.1} parent=54 // loop_body
                  %v459 = vld [vmem:[%s457] sm:$0xff]
                  %460 = vst [vmem:[%s458] sm:$0xff] %v459
                  %v461 = vld [vmem:[%s457 + $0x8] sm:$0xff]
                  %462 = vst [vmem:[%s458 + $0x8] sm:$0xff] %v461
                  %v463 = vld [vmem:[%s457 + $0x10] sm:$0xff]
                  %464 = vst [vmem:[%s458 + $0x10] sm:$0xff] %v463
                  %v465 = vld [vmem:[%s457 + $0x18] sm:$0xff]
                  %466 = vst [vmem:[%s458 + $0x18] sm:$0xff] %v465
                  %v467 = vld [vmem:[%s457 + $0x20] sm:$0xff]
                  %468 = vst [vmem:[%s458 + $0x20] sm:$0xff] %v467
                  %v469 = vld [vmem:[%s457 + $0x28] sm:$0xff]
                  %470 = vst [vmem:[%s458 + $0x28] sm:$0xff] %v469
                  %v471 = vld [vmem:[%s457 + $0x30] sm:$0xff]
                  %472 = vst [vmem:[%s458 + $0x30] sm:$0xff] %v471
                  %v473 = vld [vmem:[%s457 + $0x38] sm:$0xff]
                  %474 = vst [vmem:[%s458 + $0x38] sm:$0xff] %v473
                  %v475 = vld [vmem:[%s457 + $0x40] sm:$0xff]
                  %476 = vst [vmem:[%s458 + $0x40] sm:$0xff] %v475
                  %v477 = vld [vmem:[%s457 + $0x48] sm:$0xff]
                  %478 = vst [vmem:[%s458 + $0x90] sm:$0xff] %v477
                  %v479 = vld [vmem:[%s457 + $0x50] sm:$0xff]
                  %480 = vst [vmem:[%s458 + $0x98] sm:$0xff] %v479
                  %v481 = vld [vmem:[%s457 + $0x58] sm:$0xff]
                  %482 = vst [vmem:[%s458 + $0xa0] sm:$0xff] %v481
                  %v483 = vld [vmem:[%s457 + $0x60] sm:$0xff]
                  %484 = vst [vmem:[%s458 + $0xa8] sm:$0xff] %v483
                  %v485 = vld [vmem:[%s457 + $0x68] sm:$0xff]
                  %486 = vst [vmem:[%s458 + $0xb0] sm:$0xff] %v485
                  %v487 = vld [vmem:[%s457 + $0x70] sm:$0xff]
                  %488 = vst [vmem:[%s458 + $0xb8] sm:$0xff] %v487
                  %v489 = vld [vmem:[%s457 + $0x78] sm:$0xff]
                  %490 = vst [vmem:[%s458 + $0xc0] sm:$0xff] %v489
                  %v491 = vld [vmem:[%s457 + $0x80] sm:$0xff]
                  %492 = vst [vmem:[%s458 + $0xc8] sm:$0xff] %v491
                  %v493 = vld [vmem:[%s457 + $0x88] sm:$0xff]
                  %494 = vst [vmem:[%s458 + $0xd0] sm:$0xff] %v493
                $region60: #{stft_input_forward.1} parent=54 // loop_footer
                  %s456 = sadd.s32 1, %s452
                $region61: #{stft_input_forward.1} parent=54 // loop_footer_branch
                  %451 = sbr.rel target = $region57
                $region62: #{stft_input_forward.1} parent=54 // loop_exit
                  _
              $region55: #{stft_input_forward.1} parent=39 // pred_fallthru
                _
              // Predicated region
              $region63: #{stft_input_forward.1} parent=39 // pred_check
                _
              $region64: #{stft_input_forward.1} parent=39 // pred_check_branch
                %496 = sbr.rel target = $region66
              $region65: #{stft_input_forward.1} parent=39 // pred_region
                _
              $region66: #{stft_input_forward.1} parent=39 // pred_fallthru
                _
            $region40: #{stft_input_forward.1} parent=35 // pred_fallthru
              _
            // Predicated region
            $region41: #{stft_input_forward.1} parent=35 // pred_check
              _
            $region42: #{stft_input_forward.1} parent=35 // pred_check_branch
              %402 = sbr.rel target = $region44
            $region43: #{stft_input_forward.1} parent=35 // pred_region
              %s404 = ssub.s32 256, 1
              loop: start=0, step=1, limit=1
              $region45: #{stft_input_forward.1} parent=43 // loop_pre_header
                _
              $region46: #{stft_input_forward.1} parent=43 // loop_header
                %s406 = sphi 0, %s410
                %p407 = scmp.ge.s32.totalorder %s406, 1
                %s411 = sphi %s387, %s387
                %s412 = sphi %s396, %s396
              $region47: #{stft_input_forward.1} parent=43 // loop_header_branch
                %409 = sbr.rel (%p407) target = $region51
              $region48: #{stft_input_forward.1} parent=43 // loop_body
                %v413 = vld [vmem:[%s411] sm:%s404]
                %414 = vst [vmem:[%s412] sm:%s404] %v413
                %v415 = vld [vmem:[%s411 + $0x8] sm:%s404]
                %416 = vst [vmem:[%s412 + $0x8] sm:%s404] %v415
                %v417 = vld [vmem:[%s411 + $0x10] sm:%s404]
                %418 = vst [vmem:[%s412 + $0x10] sm:%s404] %v417
                %v419 = vld [vmem:[%s411 + $0x18] sm:%s404]
                %420 = vst [vmem:[%s412 + $0x18] sm:%s404] %v419
                %v421 = vld [vmem:[%s411 + $0x20] sm:%s404]
                %422 = vst [vmem:[%s412 + $0x20] sm:%s404] %v421
                %v423 = vld [vmem:[%s411 + $0x28] sm:%s404]
                %424 = vst [vmem:[%s412 + $0x28] sm:%s404] %v423
                %v425 = vld [vmem:[%s411 + $0x30] sm:%s404]
                %426 = vst [vmem:[%s412 + $0x30] sm:%s404] %v425
                %v427 = vld [vmem:[%s411 + $0x38] sm:%s404]
                %428 = vst [vmem:[%s412 + $0x38] sm:%s404] %v427
                %v429 = vld [vmem:[%s411 + $0x40] sm:%s404]
                %430 = vst [vmem:[%s412 + $0x40] sm:%s404] %v429
                %v431 = vld [vmem:[%s411 + $0x48] sm:%s404]
                %432 = vst [vmem:[%s412 + $0x90] sm:%s404] %v431
                %v433 = vld [vmem:[%s411 + $0x50] sm:%s404]
                %434 = vst [vmem:[%s412 + $0x98] sm:%s404] %v433
                %v435 = vld [vmem:[%s411 + $0x58] sm:%s404]
                %436 = vst [vmem:[%s412 + $0xa0] sm:%s404] %v435
                %v437 = vld [vmem:[%s411 + $0x60] sm:%s404]
                %438 = vst [vmem:[%s412 + $0xa8] sm:%s404] %v437
                %v439 = vld [vmem:[%s411 + $0x68] sm:%s404]
                %440 = vst [vmem:[%s412 + $0xb0] sm:%s404] %v439
                %v441 = vld [vmem:[%s411 + $0x70] sm:%s404]
                %442 = vst [vmem:[%s412 + $0xb8] sm:%s404] %v441
                %v443 = vld [vmem:[%s411 + $0x78] sm:%s404]
                %444 = vst [vmem:[%s412 + $0xc0] sm:%s404] %v443
                %v445 = vld [vmem:[%s411 + $0x80] sm:%s404]
                %446 = vst [vmem:[%s412 + $0xc8] sm:%s404] %v445
                %v447 = vld [vmem:[%s411 + $0x88] sm:%s404]
                %448 = vst [vmem:[%s412 + $0xd0] sm:%s404] %v447
              $region49: #{stft_input_forward.1} parent=43 // loop_footer
                %s410 = sadd.s32 1, %s406
              $region50: #{stft_input_forward.1} parent=43 // loop_footer_branch
                %405 = sbr.rel target = $region46
              $region51: #{stft_input_forward.1} parent=43 // loop_exit
                _
            $region44: #{stft_input_forward.1} parent=35 // pred_fallthru
              _
          $region36: #{stft_input_forward.1} parent=31 // pred_fallthru
            _
          %497 = vnop
        $region32: #{stft_input_forward.1} parent=27 // pred_fallthru
          _
      $region28: #{stft_input_forward.1} parent=5 // pred_fallthru
        _
      %p498 = scmp.le.s32.totalorder 2, %s8
      // Predicated region
      $region67: #{stft_input_forward.1} parent=5 // pred_check
        %p499 = pneg %p498
      $region68: #{stft_input_forward.1} parent=5 // pred_check_branch
        %501 = sbr.rel (%p499) target = $region70
      $region69: #{stft_input_forward.1} parent=5 // pred_region
        %s502 = ssub.s32 %s8, 2
        // Predicated region
        $region71: #{stft_input_forward.1} parent=69 // pred_check
          %p503 = pneg %p111
        $region72: #{stft_input_forward.1} parent=69 // pred_check_branch
          %505 = sbr.rel (%p503) target = $region74
        $region73: #{stft_input_forward.1} parent=69 // pred_region
          %s506 = sand.u32 %s96, 1
          %s507 = sand.u32 %s96, 1
          %s508 = smul.addr %s507, 144
          %s509 = scalar_lea.vmem [#allocation2], %s508
        $region74: #{stft_input_forward.1} parent=69 // pred_fallthru
          _
      $region70: #{stft_input_forward.1} parent=5 // pred_fallthru
        _
    $region6: #{stft_input_forward.1} parent=1 // loop_footer
      %s12 = sadd.s32 1, %s8
    $region7: #{stft_input_forward.1} parent=1 // loop_footer_branch
      %7 = sbr.rel target = $region3
    $region8: #{stft_input_forward.1} parent=1 // loop_exit
      _

</llo_original>
